<compile_context>
chip_gen: v6e
topology: v6e:2x2x1
jax: 0.10.0
libtpu: 0.0.40
codegen_flags: <defaults>
</compile_context>

<pallas_src>
import math

import jax
import jax.numpy as jnp
from jax.experimental import pallas as pl
from jax.experimental.pallas import tpu as pltpu


# ---------------------------------------------------------------------------
# Kernel 1: stream S -> per-block partial sums (softplus, symmetry).
# ---------------------------------------------------------------------------
def _sim_kernel(inv_temp_ref,        # SMEM (1,1) f32 : 1 / sigmoid(logit_temperature)
                sim_ref,             # VMEM (t,t)     : S block (i, j)
                sim_ji_ref,          # VMEM (t,t)     : S block (j, i)
                out_ref):            # SMEM (1,2)     : [sum softplus, sum (S-S^T)^2]
    inv_temp = inv_temp_ref[0, 0]

    s = sim_ref[...].astype(jnp.float32)
    # Block (i, j) of S^T == (block (j, i) of S)^T; transpose in-kernel.
    st = sim_ji_ref[...].astype(jnp.float32).T

    # Stable softplus = max(x,0) + log1p(exp(-|x|)); diagonal -x*y term of the
    # BCE-vs-eye target is handled in the wrapper via trace(S) * inv_temp.
    x = s * inv_temp
    softplus = jnp.maximum(x, 0.0) + jnp.log1p(jnp.exp(-jnp.abs(x)))
    d_sym = s - st

    out_ref[0, 0] = jnp.sum(softplus)
    out_ref[0, 1] = jnp.sum(d_sym * d_sym)


# ---------------------------------------------------------------------------
# Kernel 2: d x d Grams of the features -> scalar modality-difference sum.
#   sum((I I^T - T T^T)^2) = ||I^T I||_F^2 + ||T^T T||_F^2 - 2 ||I^T T||_F^2
# ---------------------------------------------------------------------------
def _gram_kernel(img_ref, txt_ref, out_ref, gi_acc, gt_acc, git_acc):
    k = pl.program_id(0)

    @pl.when(k == 0)
    def _():
        gi_acc[...] = jnp.zeros_like(gi_acc)
        gt_acc[...] = jnp.zeros_like(gt_acc)
        git_acc[...] = jnp.zeros_like(git_acc)

    img = img_ref[...].astype(jnp.float32)
    txt = txt_ref[...].astype(jnp.float32)
    img_t = img.T
    txt_t = txt.T
    gi_acc[...] += jnp.dot(img_t, img, preferred_element_type=jnp.float32)
    gt_acc[...] += jnp.dot(txt_t, txt, preferred_element_type=jnp.float32)
    git_acc[...] += jnp.dot(img_t, txt, preferred_element_type=jnp.float32)

    @pl.when(k == pl.num_programs(0) - 1)
    def _():
        out_ref[0, 0] = (jnp.sum(gi_acc[...] * gi_acc[...])
                         + jnp.sum(gt_acc[...] * gt_acc[...])
                         - 2.0 * jnp.sum(git_acc[...] * git_acc[...]))


# ---------------------------------------------------------------------------
# Generation-aware tiling helpers.
# ---------------------------------------------------------------------------
def _vmem_limit_bytes() -> int:
    cap = 64 * 1024 * 1024                       # v7x-safe fallback
    try:
        cap = int(pltpu.get_tpu_info().vmem_capacity_bytes)
    except Exception:
        pass
    limit = min((cap * 3) // 4, 96 * 1024 * 1024)  # ~48 MiB on v7x, ~96 MiB on v5e/v6e
    return max(limit, 32 * 1024 * 1024)


def _choose_s_tiling(n: int, vmem_limit: int):
    """Return (n_pad, tile).  tile is a multiple of 128 or spans the full array."""
    tile_budget = vmem_limit // 2
    # per-step f32 working set: 2 inputs x double-buffer (16 t^2) + ~6 temporaries (24 t^2)
    def fits(t):
        return 40 * t * t <= tile_budget

    if fits(n):
        return n, n                              # single full-array block (layout-legal)
    n_pad = ((n + 127) // 128) * 128
    tile = 128
    for cand in (1024, 512, 256, 128):
        if n_pad % cand == 0 and fits(cand):
            tile = cand
            break
    return n_pad, tile


def _choose_gram_tiling(n: int, d: int, vmem_limit: int):
    """Return (n_pad, row_tile) for the feature-Gram kernel."""
    acc_bytes = 3 * 4 * d * d                    # resident (d,d) f32 accumulators
    budget = max(vmem_limit - acc_bytes - (8 << 20), 4 << 20)
    def fits(t):
        return 16 * t * d <= budget              # 2 inputs x double-buffer, f32

    if fits(n):
        return n, n
    n_pad = ((n + 127) // 128) * 128
    tile = 128
    for cand in (2048, 1024, 512, 256, 128):
        if n_pad % cand == 0 and fits(cand):
            tile = cand
            break
    return n_pad, tile


# ---------------------------------------------------------------------------
# Wrapper.
# ---------------------------------------------------------------------------
def cy_siglip_loss(similarity_matrix: jax.Array,
                   image_features: jax.Array,
                   text_features: jax.Array,
                   logit_temperature: jax.Array,
                   lambda_1: float = 1.0,
                   lambda_2: float = 1.0) -> jax.Array:
    n, n2 = similarity_matrix.shape
    assert n == n2, "similarity matrix must be square (target is eye(N))"
    d = image_features.shape[-1]
    assert image_features.shape == (n, d)
    assert text_features.shape == (n, d)

    # Parameter glue: dividing by sigmoid(t) == multiplying by (1 + exp(-t)).
    inv_temp = (1.0 + jnp.exp(-logit_temperature)).astype(jnp.float32)
    inv_temp_arr = inv_temp.reshape(1, 1)

    vmem_limit = _vmem_limit_bytes()

    # --------------------- S-stream kernel (softplus + symmetry) ------------
    n_pad, tile = _choose_s_tiling(n, vmem_limit)
    sim = similarity_matrix
    if n_pad != n:
        sim = jnp.pad(sim, ((0, n_pad - n), (0, n_pad - n)))
    gi = n_pad // tile

    partials = pl.pallas_call(
        _sim_kernel,
        out_shape=jax.ShapeDtypeStruct((gi * gi, 2), jnp.float32),
        grid=(gi, gi),
        in_specs=[
            pl.BlockSpec((1, 1), lambda i, j: (0, 0), memory_space=pltpu.SMEM),
            pl.BlockSpec((tile, tile), lambda i, j: (i, j)),   # S[i, j]
            pl.BlockSpec((tile, tile), lambda i, j: (j, i)),   # S[j, i] (transposed in-kernel)
        ],
        out_specs=pl.BlockSpec((1, 2), lambda i, j: (i * gi + j, 0),
                               memory_space=pltpu.SMEM),
        compiler_params=pltpu.CompilerParams(
            dimension_semantics=("parallel", "parallel"),
            vmem_limit_bytes=vmem_limit,
        ),
    )(inv_temp_arr, sim, sim)

    bce_sum = jnp.sum(partials[:, 0], dtype=jnp.float32)
    sym_sum = jnp.sum(partials[:, 1], dtype=jnp.float32)

    n_elems = jnp.float32(n) * jnp.float32(n)
    # Padded zero entries contribute softplus(0) = ln(2) each; subtract exactly.
    pad_count = float(n_pad * n_pad - n * n)
    bce_sum = bce_sum - jnp.float32(pad_count * math.log(2.0))
    # Diagonal BCE term: sum_diag(x) = trace(S) * inv_temp (N-element read, negligible).
    trace_term = jnp.trace(similarity_matrix).astype(jnp.float32) * inv_temp
    contrastive = (bce_sum - trace_term) / n_elems
    symmetry = sym_sum / n_elems

    # --------------------- feature-Gram kernel (modality term) --------------
    m_pad, tm = _choose_gram_tiling(n, d, vmem_limit)
    img = image_features
    txt = text_features
    if m_pad != n:
        # Zero rows do not change I^T I / T^T T / I^T T.
        img = jnp.pad(img, ((0, m_pad - n), (0, 0)))
        txt = jnp.pad(txt, ((0, m_pad - n), (0, 0)))
    gk = m_pad // tm

    mod_sum = pl.pallas_call(
        _gram_kernel,
        out_shape=jax.ShapeDtypeStruct((1, 1), jnp.float32),
        grid=(gk,),
        in_specs=[
            pl.BlockSpec((tm, d), lambda k: (k, 0)),
            pl.BlockSpec((tm, d), lambda k: (k, 0)),
        ],
        out_specs=pl.BlockSpec((1, 1), lambda k: (0, 0), memory_space=pltpu.SMEM),
        scratch_shapes=[
            pltpu.VMEM((d, d), jnp.float32),
            pltpu.VMEM((d, d), jnp.float32),
            pltpu.VMEM((d, d), jnp.float32),
        ],
        compiler_params=pltpu.CompilerParams(
            dimension_semantics=("arbitrary",),
            vmem_limit_bytes=vmem_limit,
        ),
    )(img, txt)[0, 0]

    modality = mod_sum / n_elems
    return contrastive + lambda_1 * symmetry + lambda_2 * modality


if __name__ == "__main__":
    key = jax.random.PRNGKey(0)
    k1, k2, k3 = jax.random.split(key, 3)

    N, D = 16, 32
    similarity = jax.random.normal(k1, (N, N), dtype=jnp.float32)
    image_features = 0.1 * jax.random.normal(k2, (N, D), dtype=jnp.float32)
    text_features = 0.1 * jax.random.normal(k3, (N, D), dtype=jnp.float32)
    # Deterministic parameter init, matching nn.Parameter(torch.tensor(-1.0)).
    logit_temperature = jnp.float32(-1.0)

    loss = cy_siglip_loss(similarity, image_features, text_features, logit_temperature)
    loss = jax.block_until_ready(loss)

    # Pure-JAX reference of the exact PyTorch semantics.
    temperature = jax.nn.sigmoid(logit_temperature)
    x = similarity / temperature
    y = jnp.eye(N, dtype=jnp.float32)
    bce_ref = jnp.mean(jnp.maximum(x, 0.0) - x * y + jnp.log1p(jnp.exp(-jnp.abs(x))))
    sym_ref = jnp.mean((similarity - similarity.T) ** 2)
    g_img = jnp.matmul(image_features, image_features.T, precision=jax.lax.Precision.HIGHEST)
    g_txt = jnp.matmul(text_features, text_features.T, precision=jax.lax.Precision.HIGHEST)
    mod_ref = jnp.mean((g_img - g_txt) ** 2)
    ref = bce_ref + 1.0 * sym_ref + 1.0 * mod_ref

    assert jnp.allclose(loss, ref, rtol=5e-4, atol=5e-4), (loss, ref)
    print("KERNEL_OK")
</pallas_src>

<mosaic_0001>
module attributes {stable_mosaic.version = 11 : i64} {
  func.func @_sim_kernel(%arg0: i32, %arg1: i32, %arg2: memref<1x1xf32, #tpu.memory_space<smem>>, %arg3: memref<16x16xf32, #tpu.memory_space<vmem>>, %arg4: memref<16x16xf32, #tpu.memory_space<vmem>>, %arg5: memref<1x2xf32, #tpu.memory_space<smem>>) attributes {dimension_semantics = [#tpu.dimension_semantics<parallel>, #tpu.dimension_semantics<parallel>], iteration_bounds = array<i64: 1, 1>, scalar_prefetch = 0 : i64, scratch_operands = 0 : i64, tpu.core_type = #tpu.core_type<tc>, window_params = [{transform_indices = @transform_0, window_bounds = array<i64: 1, 1>}, {transform_indices = @transform_1, window_bounds = array<i64: 16, 16>}, {transform_indices = @transform_2, window_bounds = array<i64: 16, 16>}, {transform_indices = @transform_3, window_bounds = array<i64: 1, 2>}]} {
    %c0 = arith.constant 0 : index
    %c0_0 = arith.constant 0 : index
    %0 = memref.load %arg2[%c0, %c0_0] : memref<1x1xf32, #tpu.memory_space<smem>>
    %c0_1 = arith.constant 0 : index
    %c0_2 = arith.constant 0 : index
    %1 = vector.load %arg3[%c0_1, %c0_2] : memref<16x16xf32, #tpu.memory_space<vmem>>, vector<16x16xf32>
    %c0_3 = arith.constant 0 : index
    %c0_4 = arith.constant 0 : index
    %2 = vector.load %arg4[%c0_3, %c0_4] : memref<16x16xf32, #tpu.memory_space<vmem>>, vector<16x16xf32>
    %3 = tpu.transpose %2, [1, 0] : vector<16x16xf32> -> vector<16x16xf32>
    %4 = vector.broadcast %0 : f32 to vector<16x16xf32>
    %5 = arith.mulf %1, %4 : vector<16x16xf32>
    %cst = arith.constant 0.000000e+00 : f32
    %6 = vector.broadcast %cst : f32 to vector<16x16xf32>
    %7 = arith.maximumf %5, %6 : vector<16x16xf32>
    %8 = math.absf %5 : vector<16x16xf32>
    %cst_5 = arith.constant 0.000000e+00 : f32
    %9 = vector.broadcast %cst_5 : f32 to vector<16x16xf32>
    %10 = arith.subf %9, %8 : vector<16x16xf32>
    %11 = math.exp %10 : vector<16x16xf32>
    %12 = math.log1p %11 : vector<16x16xf32>
    %13 = arith.addf %7, %12 : vector<16x16xf32>
    %14 = arith.subf %1, %3 : vector<16x16xf32>
    %15 = vector.shape_cast %13 : vector<16x16xf32> to vector<1x16x16xf32>
    %cst_6 = arith.constant dense<0.000000e+00> : vector<1xf32>
    %16 = vector.multi_reduction <add>, %15, %cst_6 [1, 2] : vector<1x16x16xf32> to vector<1xf32>
    %17 = vector.shape_cast %16 : vector<1xf32> to vector<1x1x1xf32>
    %18 = vector.extract %17[0, 0, 0] : f32 from vector<1x1x1xf32>
    %c0_7 = arith.constant 0 : index
    %c0_8 = arith.constant 0 : index
    %19 = memref.load %arg5[%c0_7, %c0_8] : memref<1x2xf32, #tpu.memory_space<smem>>
    memref.store %18, %arg5[%c0_7, %c0_8] : memref<1x2xf32, #tpu.memory_space<smem>>
    %20 = arith.mulf %14, %14 : vector<16x16xf32>
    %21 = vector.shape_cast %20 : vector<16x16xf32> to vector<1x16x16xf32>
    %cst_9 = arith.constant dense<0.000000e+00> : vector<1xf32>
    %22 = vector.multi_reduction <add>, %21, %cst_9 [1, 2] : vector<1x16x16xf32> to vector<1xf32>
    %23 = vector.shape_cast %22 : vector<1xf32> to vector<1x1x1xf32>
    %24 = vector.extract %23[0, 0, 0] : f32 from vector<1x1x1xf32>
    %c0_10 = arith.constant 0 : index
    %c1 = arith.constant 1 : index
    %25 = memref.load %arg5[%c0_10, %c1] : memref<1x2xf32, #tpu.memory_space<smem>>
    memref.store %24, %arg5[%c0_10, %c1] : memref<1x2xf32, #tpu.memory_space<smem>>
    return
  }
  func.func @transform_0(%arg0: i32, %arg1: i32) -> (i32, i32) {
    %c0_i32 = arith.constant 0 : i32
    %c0_i32_0 = arith.constant 0 : i32
    %c0_i32_1 = arith.constant 0 : i32
    return %c0_i32, %c0_i32_0 : i32, i32
  }
  func.func @transform_1(%arg0: i32, %arg1: i32) -> (i32, i32) {
    %c0_i32 = arith.constant 0 : i32
    return %arg0, %arg1 : i32, i32
  }
  func.func @transform_2(%arg0: i32, %arg1: i32) -> (i32, i32) {
    %c0_i32 = arith.constant 0 : i32
    return %arg1, %arg0 : i32, i32
  }
  func.func @transform_3(%arg0: i32, %arg1: i32) -> (i32, i32) {
    %c1_i32 = arith.constant 1 : i32
    %0 = arith.muli %arg0, %c1_i32 : i32
    %1 = arith.addi %0, %arg1 : i32
    %c0_i32 = arith.constant 0 : i32
    %c0_i32_0 = arith.constant 0 : i32
    return %1, %c0_i32 : i32, i32
  }
}

</mosaic_0001>

<llo_original>
// kernel: tpu_custom_call.1
$region0: #{tpu_custom_call.1}
  #allocation0 [shape = 'u32[]', space=smem, size = 0x4, offset = 0x4, fixed_abs, tag = 'smem constant byte address 0x4 - core index']
  #allocation1 [shape = 'u32[144,128]{1,0:T(1,128)}', space=vmem, size = 0x12000, scoped, tag = 'internal scratch']
  #allocation2 [shape = 'f32[1,1]{1,0:T(1,128)S(6)}', space=smem, size = 0x200, scoped, tag = 'scoped memory for tpu_custom_call.1']
  %s0 = inlined_call_operand.<no memory space> [shape: f32[1,1], index: 0, kind: input, shape index: {}]
  %s1 = inlined_call_operand.hbm [shape: f32[16,16], index: 1, kind: input, shape index: {}]
  %s2 = inlined_call_operand.hbm [shape: f32[16,16], index: 2, kind: input, shape index: {}]
  %s3 = inlined_call_operand.hbm [shape: f32[1,2], index: 3, kind: output, shape index: {}]
  %s4 = sld [smem:[#allocation0]]
  $region30: #{tpu_custom_call.1} parent=0
    _
  %s6 = ssub.s32 1, %s4
  %s7 = scalar_select 0, %s6, %s4
  %8 = sst [smem:[#allocation2]] %s0
  $region1: #{tpu_custom_call.1} parent=0
    #allocation3 [shape = 'u8[8192]{0}', space=vmem, size = 0x2000, scoped, tag = 'input window, operand 1, single buffered']
    #allocation4 [shape = 's32[1]{0}', space=sflag, size = 0x4, scoped, tag = 'scoped memory for tpu_custom_call.1']
    #allocation5 [shape = 's32[1]{0}', space=sflag, size = 0x4, scoped, tag = 'scoped memory for tpu_custom_call.1']
    #allocation6 [shape = 'u8[8192]{0}', space=vmem, size = 0x2000, scoped, tag = 'input window, operand 2, single buffered']
    #allocation7 [shape = 's32[1]{0}', space=sflag, size = 0x4, scoped, tag = 'scoped memory for tpu_custom_call.1']
    #allocation8 [shape = 'u8[512]{0}', space=smem, size = 0x200, scoped, tag = 'output window, operand 0, single buffered']
    %9 = vsyncpa [#allocation4], 0
    %10 = vsyncpa [#allocation7], 0
    %11 = vsyncpa [#allocation5], 0
    // Predicated region
    $region2: #{tpu_custom_call.1} parent=1 // pred_check
      _
    $region3: #{tpu_custom_call.1} parent=1 // pred_check_branch
      %13 = sbr.rel (0) target = $region5
    $region4: #{tpu_custom_call.1} parent=1 // pred_region
      _
    $region5: #{tpu_custom_call.1} parent=1 // pred_fallthru
      _
    // Predicated region
    $region6: #{tpu_custom_call.1} parent=1 // pred_check
      _
    $region7: #{tpu_custom_call.1} parent=1 // pred_check_branch
      %15 = sbr.rel (0) target = $region9
    $region8: #{tpu_custom_call.1} parent=1 // pred_region
      %s17 = ssub.s32 256, 256
      %18 = vsyncadd [#allocation4], %s17
      %s19 = sshll.u32 [#allocation3], 4
      %s20 = int_to_ptr.vmem [resolvable:$true] %s19
      %25 = dma.hbm_to_vmem [thread:$0]  %s1, 256, %s20, [#allocation4], 128, 128, 8
    $region9: #{tpu_custom_call.1} parent=1 // pred_fallthru
      _
    // Predicated region
    $region10: #{tpu_custom_call.1} parent=1 // pred_check
      _
    $region11: #{tpu_custom_call.1} parent=1 // pred_check_branch
      %27 = sbr.rel (0) target = $region13
    $region12: #{tpu_custom_call.1} parent=1 // pred_region
      %s29 = ssub.s32 256, 256
      %30 = vsyncadd [#allocation7], %s29
      %s31 = sshll.u32 [#allocation6], 4
      %s32 = int_to_ptr.vmem [resolvable:$true] %s31
      %37 = dma.hbm_to_vmem [thread:$0]  %s2, 256, %s32, [#allocation7], 128, 128, 8
    $region13: #{tpu_custom_call.1} parent=1 // pred_fallthru
      _
    // Predicated region
    $region14: #{tpu_custom_call.1} parent=1 // pred_check
      _
    $region15: #{tpu_custom_call.1} parent=1 // pred_check_branch
      %39 = sbr.rel (0) target = $region17
    $region16: #{tpu_custom_call.1} parent=1 // pred_region
      %40 = dma.done [#allocation4], 256
    $region17: #{tpu_custom_call.1} parent=1 // pred_fallthru
      _
    // Predicated region
    $region18: #{tpu_custom_call.1} parent=1 // pred_check
      _
    $region19: #{tpu_custom_call.1} parent=1 // pred_check_branch
      %42 = sbr.rel (0) target = $region21
    $region20: #{tpu_custom_call.1} parent=1 // pred_region
      %43 = dma.done [#allocation7], 256
    $region21: #{tpu_custom_call.1} parent=1 // pred_fallthru
      _
    %s44 = sadd.s32 0, 0
    %s45 = sld [smem:[#allocation2]]
    %v46 = vld [vmem:[#allocation3] sm:$0xff]
    %v47 = vld [vmem:[#allocation3 + $0x8] sm:$0xff]
    %v48 = vld [vmem:[#allocation6] sm:$0xff]
    %v49 = vld [vmem:[#allocation6 + $0x8] sm:$0xff]
    %50 = vxpose.xlu0.b32.start [1/16] %v48, 128
    %51 = vxpose.xlu0.b32.cont [2/16] %v49, 128
    %52 = vxpose.xlu0.b32.cont [3/16] 0.0, 128
    %53 = vxpose.xlu0.b32.cont [4/16] 0.0, 128
    %54 = vxpose.xlu0.b32.cont [5/16] 0.0, 128
    %55 = vxpose.xlu0.b32.cont [6/16] 0.0, 128
    %56 = vxpose.xlu0.b32.cont [7/16] 0.0, 128
    %57 = vxpose.xlu0.b32.cont [8/16] 0.0, 128
    %58 = vxpose.xlu0.b32.cont [9/16] 0.0, 128
    %59 = vxpose.xlu0.b32.cont [10/16] 0.0, 128
    %60 = vxpose.xlu0.b32.cont [11/16] 0.0, 128
    %61 = vxpose.xlu0.b32.cont [12/16] 0.0, 128
    %62 = vxpose.xlu0.b32.cont [13/16] 0.0, 128
    %63 = vxpose.xlu0.b32.cont [14/16] 0.0, 128
    %64 = vxpose.xlu0.b32.cont [15/16] 0.0, 128
    %65 = vxpose.xlu0.b32.end [16/16] 0.0, 128
    %v66 = vpop.trf.xlu0
    %v67 = vpop.trf.xlu0
    %v68 = vpop.trf.xlu0
    %v69 = vpop.trf.xlu0
    %v70 = vpop.trf.xlu0
    %v71 = vpop.trf.xlu0
    %v72 = vpop.trf.xlu0
    %v73 = vpop.trf.xlu0
    %v74 = vpop.trf.xlu0
    %v75 = vpop.trf.xlu0
    %v76 = vpop.trf.xlu0
    %v77 = vpop.trf.xlu0
    %v78 = vpop.trf.xlu0
    %v79 = vpop.trf.xlu0
    %v80 = vpop.trf.xlu0
    %v81 = vpop.trf.xlu0
    %v82 = vstv %s45
    %v83 = vmul.f32 %v46, %v82
    %v84 = vmul.f32 %v47, %v82
    %v85 = vmax.f32 %v83, 0.0
    %v86 = vmax.f32 %v84, 0.0
    %v87 = vand.u32 2147483647, %v83
    %v88 = vand.u32 2147483647, %v84
    %v89 = vsub.f32 0.0, %v87
    %v90 = vsub.f32 0.0, %v88
    %v91 = vmul.f32 %v89, 1.442695
    %v92 = vpow.pop %v91
    %v93 = vmul.f32 %v90, 1.442695
    %v94 = vpow.pop %v93
    %v95 = vadd.f32 %v92, 1.0
    %v96 = vlog2.pop %v95
    %v97 = vmul.f32 %v96, 0.6931472
    %v98 = vmul.f32 -0.5, %v92
    %v99 = vadd.f32 %v98, 1.0
    %v100 = vmul.f32 %v99, %v92
    %v101 = vand.u32 2147483647, %v92
    %vm102 = vcmp.lt.f32.partialorder %v101, 0.0004427343
    %v103 = vsel %vm102, %v100, %v97
    %v104 = vadd.f32 %v94, 1.0
    %v105 = vlog2.pop %v104
    %v106 = vmul.f32 %v105, 0.6931472
    %v107 = vmul.f32 -0.5, %v94
    %v108 = vadd.f32 %v107, 1.0
    %v109 = vmul.f32 %v108, %v94
    %v110 = vand.u32 2147483647, %v94
    %vm111 = vcmp.lt.f32.partialorder %v110, 0.0004427343
    %v112 = vsel %vm111, %v109, %v106
    %v113 = vadd.f32 %v85, %v103
    %v114 = vadd.f32 %v86, %v112
    %v115 = vsub.f32 %v46, %v66
    %v116 = vsub.f32 %v47, %v67
    %vm117 = vcmask 130048
    %v118 = vsel %vm117, %v113, 0.0
    %v119 = vsel %vm117, %v114, 0.0
    %v120 = vadd.f32 %v118, %v119
    %121 = vadd.xlane.f32.xlu0 %v120
    %v122 = vpop.xlane.xlu0 %121
    %v123 = vrot.slane %v122, 4
    %v124 = vadd.f32 %v122, %v123
    %v125 = vrot.slane %v124, 2
    %v126 = vadd.f32 %v124, %v125
    %v127 = vrot.slane %v126, 1
    %v128 = vadd.f32 %v126, %v127
    %s129 = vtos %v128
    %s130 = scalar_lea.smem [#allocation8], 0
    %131 = sst [smem:[%s130]] %s129
    %v132 = vmul.f32 %v115, %v115
    %v133 = vmul.f32 %v116, %v116
    %v134 = vsel %vm117, %v132, 0.0
    %v135 = vsel %vm117, %v133, 0.0
    %v136 = vadd.f32 %v134, %v135
    %137 = vadd.xlane.f32.xlu0 %v136
    %v138 = vpop.xlane.xlu0 %137
    %v139 = vrot.slane %v138, 4
    %v140 = vadd.f32 %v138, %v139
    %v141 = vrot.slane %v140, 2
    %v142 = vadd.f32 %v140, %v141
    %v143 = vrot.slane %v142, 1
    %v144 = vadd.f32 %v142, %v143
    %s145 = vtos %v144
    %s146 = scalar_lea.smem [#allocation8], 1
    %147 = sst [smem:[%s146]] %s145
    // Predicated region
    $region22: #{tpu_custom_call.1} parent=1 // pred_check
      _
    $region23: #{tpu_custom_call.1} parent=1 // pred_check_branch
      %149 = sbr.rel (0) target = $region25
    $region24: #{tpu_custom_call.1} parent=1 // pred_region
      %s150 = sadd.s32 0, 0
      %s152 = ssub.s32 16, 16
      %153 = vsyncadd [#allocation5], %s152
      %s154 = smul.addr %s150, 16
      %s155 = scalar_lea.hbm %s3, %s154
      %158 = dma.smem_to_hbm [#allocation8], 16, %s155, [#allocation5]
    $region25: #{tpu_custom_call.1} parent=1 // pred_fallthru
      _
    // Predicated region
    $region26: #{tpu_custom_call.1} parent=1 // pred_check
      _
    $region27: #{tpu_custom_call.1} parent=1 // pred_check_branch
      %160 = sbr.rel (0) target = $region29
    $region28: #{tpu_custom_call.1} parent=1 // pred_region
      %161 = dma.done [#allocation5], 16
    $region29: #{tpu_custom_call.1} parent=1 // pred_fallthru
      _
    %162 = sfence
    %163 = vsyncpa [#allocation4], 1
    %164 = vsyncpa [#allocation7], 1
    %165 = vsyncpa [#allocation5], 1

</llo_original>
